<compile_context>
chip_gen: v5e
topology: v5e:2x2
jax: 0.10.0
libtpu: 0.0.40
codegen_flags: <defaults>
</compile_context>

<pallas_src>
import jax
import jax.numpy as jnp
from jax import lax
from jax.experimental import pallas as pl
from jax.experimental.pallas import tpu as pltpu


def _nll_kernel_factory(packed: bool, weighted: bool):
    """Build a kernel specialized (at trace time) on layout and weighting."""

    def body(pred_ref, tcol_ref, e_ref, s_ref, n_ref):
        # pred_ref: (Bn, L)  log-probs (L = 128 when packed, else L = C)
        # tcol_ref: (Bn, G)  f32 absolute target-lane per sub-row (packed)
        #           (Bn, 1)  int32 target class per row          (general)
        # e_ref   : (G, L)   constant 0/1 segment-expansion matrix (packed)
        # s_ref   : (8, L)   f32 per-lane sum of selected log-probs
        # n_ref   : (8, L)   f32 per-lane count of selected rows (weighted)
        @pl.when(pl.program_id(1) == 0)
        def _init():
            s_ref[...] = jnp.zeros_like(s_ref)
            if weighted:
                n_ref[...] = jnp.zeros_like(n_ref)

        x = pred_ref[...]                                    # (Bn, L)
        bn, l = x.shape
        col = lax.broadcasted_iota(jnp.int32, (bn, l), 1)    # lane index

        if packed:
            # Expand (Bn, G) target lanes to (Bn, L) with one small MXU
            # matmul (values are small exact integers; -1 == padded row).
            tgt_lane = jnp.dot(tcol_ref[...], e_ref[...],
                               preferred_element_type=jnp.float32)
            tgt_lane = tgt_lane.astype(jnp.int32)
        else:
            tgt_lane = tcol_ref[...]                         # (Bn, 1) -> lane bcast

        mask = col == tgt_lane                               # padded rows: all False

        # Masked select (not onehot * pred -> would give 0 * -inf = NaN).
        sel = jnp.where(mask, x, jnp.zeros_like(x)).astype(jnp.float32)
        s_ref[0:1, :] += jnp.sum(sel, axis=0, keepdims=True)
        if weighted:
            n_ref[0:1, :] += jnp.sum(mask.astype(jnp.float32), axis=0,
                                     keepdims=True)

    if packed and weighted:
        def kernel(p, t, e, s, n): body(p, t, e, s, n)
    elif packed:
        def kernel(p, t, e, s): body(p, t, e, s, None)
    elif weighted:
        def kernel(p, t, s, n): body(p, t, None, s, n)
    else:
        def kernel(p, t, s): body(p, t, None, s, None)
    return kernel


def unmasked_weighted_nll_loss(pred, target, weight=None, *,
                               block_target_bytes=4 * 1024 * 1024,
                               num_par=2):
    """pred: (N, C) log-probs; target: (N,) ints; weight: optional (C,)."""
    N, C = pred.shape
    weighted = weight is not None

    # Lane-dense packing: fold G consecutive rows into one 128-lane row.
    G = 128 // C if (C <= 128 and 128 % C == 0) else 1
    L = G * C

    itemsize = jnp.dtype(pred.dtype).itemsize
    sub = {4: 8, 2: 16, 1: 32}.get(itemsize, 8)     # sublane packing of pred

    def _up(a, m):
        return -(-a // m) * m

    np_needed = -(-N // G)                          # packed rows needed
    # Size blocks by f32-equivalent footprint so in-kernel f32 temporaries
    # stay bounded regardless of input dtype.
    bn_target = max(sub, (block_target_bytes // (L * 4)) // sub * sub)
    steps = max(1, -(-np_needed // (num_par * bn_target)))
    bn = _up(max(1, -(-np_needed // (num_par * steps))), sub)
    np_pad = num_par * steps * bn                   # padded packed rows
    n_pad = np_pad * G                              # padded original rows

    # ---- wrapper-side packing (free reshapes; pad only when needed) ----
    if n_pad != N:
        pred_p = jnp.pad(pred, ((0, n_pad - N), (0, 0)))
        tgt_p = jnp.pad(target.astype(jnp.int32), (0, n_pad - N))
    else:
        pred_p = pred
        tgt_p = target.astype(jnp.int32)
    pred_p = pred_p.reshape(np_pad, L)              # row-major -> free

    idx = jnp.arange(n_pad, dtype=jnp.int32)
    lane_of_tgt = (idx % G) * C + tgt_p             # absolute target lane
    tcol = jnp.where(idx < N, lane_of_tgt, -1)      # -1 masks padded rows

    row_map = lambda p, i: (p * steps + i, 0)
    if G > 1:
        tcol = tcol.reshape(np_pad, G).astype(jnp.float32)
        seg = (jnp.arange(L, dtype=jnp.int32)[None, :] // C
               == jnp.arange(G, dtype=jnp.int32)[:, None])
        e_mat = seg.astype(jnp.float32)             # (G, L) 0/1 expansion
        extra_in = [e_mat]
        extra_specs = [pl.BlockSpec((G, L), lambda p, i: (0, 0))]
    else:
        tcol = tcol.reshape(np_pad, 1)
        extra_in, extra_specs = [], []

    in_specs = [pl.BlockSpec((bn, L), row_map),
                pl.BlockSpec((bn, tcol.shape[1]), row_map)] + extra_specs

    acc_shape = jax.ShapeDtypeStruct((num_par * 8, L), jnp.float32)
    acc_spec = pl.BlockSpec((8, L), lambda p, i: (p, 0))
    if weighted:
        out_shape = (acc_shape, acc_shape)
        out_specs = (acc_spec, acc_spec)
    else:
        out_shape = (acc_shape,)
        out_specs = (acc_spec,)

    kernel = _nll_kernel_factory(packed=(G > 1), weighted=weighted)

    cost = pl.CostEstimate(
        flops=6 * np_pad * L,
        transcendentals=0,
        bytes_accessed=(np_pad * L * itemsize
                        + tcol.size * jnp.dtype(tcol.dtype).itemsize
                        + (2 if weighted else 1) * num_par * 8 * L * 4))

    outs = pl.pallas_call(
        kernel,
        out_shape=out_shape,
        grid=(num_par, steps),
        in_specs=in_specs,
        out_specs=out_specs,
        compiler_params=pltpu.CompilerParams(
            dimension_semantics=("parallel", "arbitrary"),
            vmem_limit_bytes=48 * 1024 * 1024),
        cost_estimate=cost,
    )(pred_p, tcol, *extra_in)

    if weighted:
        s_acc, n_acc = outs
        w_lane = jnp.tile(weight.astype(jnp.float32), G)      # (L,)
        num = jnp.sum(s_acc * w_lane[None, :])
        den = jnp.sum(n_acc * w_lane[None, :])
        return -num / den
    (s_acc,) = outs
    return -jnp.sum(s_acc)


def nll_loss_ref(pred, target, weight=None):
    """Pure-JAX reference mirroring the PyTorch forward."""
    N, _ = pred.shape
    gathered = pred[jnp.arange(N), target]
    if weight is None:
        return -jnp.sum(gathered)
    w_t = weight[target]
    return -jnp.sum(w_t * gathered) / jnp.sum(w_t)


if __name__ == "__main__":
    key = jax.random.PRNGKey(0)

    def make_case(k, n_rows, n_classes):
        k1, k2, k3 = jax.random.split(k, 3)
        logits = jax.random.normal(k1, (n_rows, n_classes), dtype=jnp.float32)
        pred = jax.nn.log_softmax(logits, axis=-1)    # NLLLoss expects log-probs
        target = jax.random.randint(k2, (n_rows,), 0, n_classes, dtype=jnp.int32)
        weight = jax.random.uniform(k3, (n_classes,), dtype=jnp.float32,
                                    minval=0.5, maxval=1.5)
        return pred, target, weight

    k0, k1, k2 = jax.random.split(key, 3)

    # Module-sized case: batch=2, seq_len=8, n_classes=8 -> N = 16 (packed path).
    pred, target, weight = make_case(k0, 2 * 8, 8)
    loss_u = unmasked_weighted_nll_loss(pred, target, weight=None)
    loss_w = unmasked_weighted_nll_loss(pred, target, weight=weight)

    # Larger ragged N with a small block target: multiple pipelined grid
    # steps per parallel half + in-wrapper tail padding/masking.
    pred2, target2, weight2 = make_case(k1, 5000, 8)
    loss2 = unmasked_weighted_nll_loss(pred2, target2, weight=weight2,
                                       block_target_bytes=64 * 1024)

    # Non-packable class count (128 % 100 != 0) exercises the general path.
    pred3, target3, weight3 = make_case(k2, 50, 100)
    loss3 = unmasked_weighted_nll_loss(pred3, target3, weight=weight3)

    jax.block_until_ready((loss_u, loss_w, loss2, loss3))

    assert jnp.allclose(loss_u, nll_loss_ref(pred, target, None),
                        atol=1e-4, rtol=1e-4)
    assert jnp.allclose(loss_w, nll_loss_ref(pred, target, weight),
                        atol=1e-4, rtol=1e-4)
    assert jnp.allclose(loss2, nll_loss_ref(pred2, target2, weight2),
                        atol=1e-4, rtol=1e-4)
    assert jnp.allclose(loss3, nll_loss_ref(pred3, target3, weight3),
                        atol=1e-4, rtol=1e-4)

    print("KERNEL_OK")
</pallas_src>

<mosaic_0001>
module attributes {stable_mosaic.version = 11 : i64} {
  func.func @kernel(%arg0: i32, %arg1: i32, %arg2: memref<8x128xf32, #tpu.memory_space<vmem>>, %arg3: memref<8x16xf32, #tpu.memory_space<vmem>>, %arg4: memref<16x128xf32, #tpu.memory_space<vmem>>, %arg5: memref<8x128xf32, #tpu.memory_space<vmem>>) attributes {dimension_semantics = [#tpu.dimension_semantics<parallel>, #tpu.dimension_semantics<arbitrary>], iteration_bounds = array<i64: 2, 1>, scalar_prefetch = 0 : i64, scratch_operands = 0 : i64, tpu.core_type = #tpu.core_type<tc>, window_params = [{transform_indices = @transform_0, window_bounds = array<i64: 8, 128>}, {transform_indices = @transform_1, window_bounds = array<i64: 8, 16>}, {pipeline_mode = #tpu.pipeline_mode<synchronous>, transform_indices = @transform_2, window_bounds = array<i64: 16, 128>}, {transform_indices = @transform_3, window_bounds = array<i64: 8, 128>}]} {
    %c0_i32 = arith.constant 0 : i32
    %0 = arith.cmpi eq, %arg1, %c0_i32 : i32
    %1 = arith.extui %0 : i1 to i32
    %c0_i32_0 = arith.constant 0 : i32
    %2 = arith.cmpi ne, %1, %c0_i32_0 : i32
    scf.if %2 {
      %cst_12 = arith.constant 0.000000e+00 : f32
      %17 = vector.broadcast %cst_12 : f32 to vector<8x128xf32>
      %c0_13 = arith.constant 0 : index
      %c0_14 = arith.constant 0 : index
      %18 = vector.load %arg5[%c0_13, %c0_14] : memref<8x128xf32, #tpu.memory_space<vmem>>, vector<8x128xf32>
      tpu.vector_store %arg5[%c0_13, %c0_14], %17 {strides = array<i32>} : memref<8x128xf32, #tpu.memory_space<vmem>>, vector<8x128xf32>,
    } else {
    }
    %c0 = arith.constant 0 : index
    %c0_1 = arith.constant 0 : index
    %3 = vector.load %arg2[%c0, %c0_1] : memref<8x128xf32, #tpu.memory_space<vmem>>, vector<8x128xf32>
    %4 = tpu.iota {dimensions = array<i32: 1>} : vector<8x128xi32>
    %c0_2 = arith.constant 0 : index
    %c0_3 = arith.constant 0 : index
    %5 = vector.load %arg3[%c0_2, %c0_3] : memref<8x16xf32, #tpu.memory_space<vmem>>, vector<8x16xf32>
    %c0_4 = arith.constant 0 : index
    %c0_5 = arith.constant 0 : index
    %6 = vector.load %arg4[%c0_4, %c0_5] : memref<16x128xf32, #tpu.memory_space<vmem>>, vector<16x128xf32>
    %cst = arith.constant dense<0.000000e+00> : vector<8x128xf32>
    %7 = tpu.matmul %5, %6, %cst {dimension_numbers = #tpu.dot_dimension_numbers<[1], [0], [0], [1], [0, 0, 1, 1], [], []>} : vector<8x16xf32>, vector<16x128xf32>, vector<8x128xf32> -> vector<8x128xf32>
    %8 = arith.fptosi %7 : vector<8x128xf32> to vector<8x128xi32>
    %9 = arith.cmpi eq, %4, %8 : vector<8x128xi32>
    %cst_6 = arith.constant 0.000000e+00 : f32
    %10 = vector.broadcast %cst_6 : f32 to vector<8x128xf32>
    %11 = arith.select %9, %3, %10 : vector<8x128xi1>, vector<8x128xf32>
    %c0_7 = arith.constant 0 : index
    %c0_8 = arith.constant 0 : index
    %12 = vector.load %arg5[%c0_7, %c0_8] : memref<8x128xf32, #tpu.memory_space<vmem>>, vector<1x128xf32>
    %cst_9 = arith.constant dense<0.000000e+00> : vector<128xf32>
    %13 = vector.multi_reduction <add>, %11, %cst_9 [0] : vector<8x128xf32> to vector<128xf32>
    %14 = vector.shape_cast %13 : vector<128xf32> to vector<1x128xf32>
    %15 = arith.addf %12, %14 : vector<1x128xf32>
    %c0_10 = arith.constant 0 : index
    %c0_11 = arith.constant 0 : index
    %16 = vector.load %arg5[%c0_10, %c0_11] : memref<8x128xf32, #tpu.memory_space<vmem>>, vector<1x128xf32>
    tpu.vector_store %arg5[%c0_10, %c0_11], %15 {strides = array<i32>} : memref<8x128xf32, #tpu.memory_space<vmem>>, vector<1x128xf32>,
    return
  }
  func.func @transform_0(%arg0: i32, %arg1: i32) -> (i32, i32) {
    %c1_i32 = arith.constant 1 : i32
    %0 = arith.muli %arg0, %c1_i32 : i32
    %1 = arith.addi %0, %arg1 : i32
    %c0_i32 = arith.constant 0 : i32
    %c0_i32_0 = arith.constant 0 : i32
    return %1, %c0_i32 : i32, i32
  }
  func.func @transform_1(%arg0: i32, %arg1: i32) -> (i32, i32) {
    %c1_i32 = arith.constant 1 : i32
    %0 = arith.muli %arg0, %c1_i32 : i32
    %1 = arith.addi %0, %arg1 : i32
    %c0_i32 = arith.constant 0 : i32
    %c0_i32_0 = arith.constant 0 : i32
    return %1, %c0_i32 : i32, i32
  }
  func.func @transform_2(%arg0: i32, %arg1: i32) -> (i32, i32) {
    %c0_i32 = arith.constant 0 : i32
    %c0_i32_0 = arith.constant 0 : i32
    %c0_i32_1 = arith.constant 0 : i32
    return %c0_i32, %c0_i32_0 : i32, i32
  }
  func.func @transform_3(%arg0: i32, %arg1: i32) -> (i32, i32) {
    %c0_i32 = arith.constant 0 : i32
    %c0_i32_0 = arith.constant 0 : i32
    return %arg0, %c0_i32 : i32, i32
  }
}

</mosaic_0001>

<llo_original>
// kernel: tpu_custom_call.1
$region0: #{tpu_custom_call.1}
  #allocation0 [shape = 'u32[]', space=smem, size = 0x4, offset = 0x4, fixed_abs, tag = 'smem constant byte address 0x4 - core index']
  #allocation1 [shape = 'u32[72,128]{1,0:T(1,128)}', space=vmem, size = 0x9000, scoped, tag = 'internal scratch']
  %s0 = inlined_call_operand.hbm [shape: f32[16,128], index: 0, kind: input, shape index: {}]
  %s1 = inlined_call_operand.hbm [shape: f32[16,16], index: 1, kind: input, shape index: {}]
  %s2 = inlined_call_operand.hbm [shape: f32[16,128], index: 2, kind: input, shape index: {}]
  %s3 = inlined_call_operand.hbm [shape: f32[16,128], index: 3, kind: output, shape index: {}]
  %s4 = sld [smem:[#allocation0]]
  $region61: #{tpu_custom_call.1} parent=0
    _
  %s6 = ssub.s32 1, %s4
  %s7 = scalar_select 0, %s6, %s4
  $region1: #{tpu_custom_call.1} parent=0
    #allocation2 [shape = 'u8[8192]{0}', space=vmem, size = 0x2000, scoped, tag = 'input window, operand 0']
    #allocation3 [shape = 's32[2]{0}', space=sflag, size = 0x8, scoped, tag = 'scoped memory for tpu_custom_call.1']
    #allocation4 [shape = 's32[2]{0}', space=sflag, size = 0x8, scoped, tag = 'scoped memory for tpu_custom_call.1']
    #allocation5 [shape = 'u8[8192]{0}', space=vmem, size = 0x2000, scoped, tag = 'input window, operand 1']
    #allocation6 [shape = 's32[2]{0}', space=sflag, size = 0x8, scoped, tag = 'scoped memory for tpu_custom_call.1']
    #allocation7 [shape = 'u8[8192]{0}', space=vmem, size = 0x2000, scoped, tag = 'input window, operand 2, single buffered']
    #allocation8 [shape = 'u8[8192]{0}', space=vmem, size = 0x2000, scoped, tag = 'output window, operand 0']
    %8 = vsyncpa [#allocation3], 0
    %s9 = scalar_lea.sflag [#allocation3], 1
    %10 = vsyncpa %s9, 0
    %11 = vsyncpa [#allocation6], 0
    %s12 = scalar_lea.sflag [#allocation6], 1
    %13 = vsyncpa %s12, 0
    %14 = vsyncpa [#allocation4], 0
    %s15 = scalar_lea.sflag [#allocation4], 1
    %16 = vsyncpa %s15, 0
    loop: start=0, step=1, limit=4
    $region2: #{tpu_custom_call.1} parent=1 // loop_pre_header
      _
    $region3: #{tpu_custom_call.1} parent=1 // loop_header
      %s18 = sphi 0, %s22
      %p19 = scmp.ge.s32.totalorder %s18, 4
      %s25 = sphi 0, %s37
      %s26 = sphi 0, %s33
      %s27 = sphi 0, %s25
      %s28 = sphi 0, %s26
      %s29 = sphi 0, %s27
      %s30 = sphi 0, %s28
      %s42 = sphi 0, %s44
      %s45 = sphi 0, %s42
      %s46 = sphi 0, %s45
      %s62 = sphi 0, %s46
      %s70 = sphi 0, %s72
      %s73 = sphi 0, %s70
      %s74 = sphi 0, %s73
      %s90 = sphi 0, %s74
      %s94 = sphi 0, %s94
      %s96 = sphi 0, %s94
      %s97 = sphi 0, %s96
      %s111 = sphi 0, %s97
      %s117 = sphi 0, %s119
      %s120 = sphi 0, %s117
      %s121 = sphi 0, %s120
      %s137 = sphi 0, %s121
    $region4: #{tpu_custom_call.1} parent=1 // loop_header_branch
      %21 = sbr.rel (%p19) target = $region8
    $region5: #{tpu_custom_call.1} parent=1 // loop_body
      %s23 = ssub.s32 %s18, 1
      %s24 = ssub.s32 %s18, 2
      %s31 = sadd.s32 1, %s26
      %p32 = scmp.ge.s32.totalorder %s31, 1
      %s33 = scalar_select %p32, 0, %s31
      %s34 = sadd.s32 1, %s25
      %s35 = scalar_select %p32, %s34, %s25
      %p36 = scmp.ge.s32.totalorder %s35, 2
      %s37 = scalar_select %p36, 0, %s35
      %s38 = sadd.s32 %s25, %s26
      %s39 = sadd.s32 %s37, %s33
      %s40 = ssub.s32 %s38, %s39
      %p41 = scmp.eq.s32.totalorder %s40, 0
      %s43 = sadd.s32 %s42, 1
      %s44 = scalar_select %p41, %s42, %s43
      %p47 = pneg %p41
      %p48 = scmp.eq.s32.totalorder %s18, 1
      %p49 = por %p47, %p48
      %p50 = scmp.ne.s32.totalorder %s42, %s45
      %p51 = scmp.eq.s32.totalorder %s18, 0
      %p52 = por %p50, %p51
      %p53 = scmp.ne.s32.totalorder %s42, %s45
      %p54 = scmp.eq.s32.totalorder %s23, 1
      %p55 = por %p53, %p54
      %p56 = scmp.ne.s32.totalorder %s45, %s46
      %p57 = scmp.eq.s32.totalorder %s23, 0
      %p58 = por %p56, %p57
      %p59 = scmp.ne.s32.totalorder %s45, %s46
      %p60 = scmp.eq.s32.totalorder %s24, 1
      %p61 = por %p59, %p60
      %p63 = scmp.ne.s32.totalorder %s46, %s62
      %p64 = scmp.eq.s32.totalorder %s24, 0
      %p65 = por %p63, %p64
      %s66 = sadd.s32 %s25, %s26
      %s67 = sadd.s32 %s37, %s33
      %s68 = ssub.s32 %s66, %s67
      %p69 = scmp.eq.s32.totalorder %s68, 0
      %s71 = sadd.s32 %s70, 1
      %s72 = scalar_select %p69, %s70, %s71
      %p75 = pneg %p69
      %p76 = scmp.eq.s32.totalorder %s18, 1
      %p77 = por %p75, %p76
      %p78 = scmp.ne.s32.totalorder %s70, %s73
      %p79 = scmp.eq.s32.totalorder %s18, 0
      %p80 = por %p78, %p79
      %p81 = scmp.ne.s32.totalorder %s70, %s73
      %p82 = scmp.eq.s32.totalorder %s23, 1
      %p83 = por %p81, %p82
      %p84 = scmp.ne.s32.totalorder %s73, %s74
      %p85 = scmp.eq.s32.totalorder %s23, 0
      %p86 = por %p84, %p85
      %p87 = scmp.ne.s32.totalorder %s73, %s74
      %p88 = scmp.eq.s32.totalorder %s24, 1
      %p89 = por %p87, %p88
      %p91 = scmp.ne.s32.totalorder %s74, %s90
      %p92 = scmp.eq.s32.totalorder %s24, 0
      %p93 = por %p91, %p92
      %s95 = sadd.s32 %s94, 1
      %p98 = scmp.eq.s32.totalorder %s18, 1
      %p99 = scmp.ne.s32.totalorder %s94, %s96
      %p100 = scmp.eq.s32.totalorder %s18, 0
      %p101 = por %p99, %p100
      %p102 = scmp.ne.s32.totalorder %s94, %s96
      %p103 = scmp.eq.s32.totalorder %s23, 1
      %p104 = por %p102, %p103
      %p105 = scmp.ne.s32.totalorder %s96, %s97
      %p106 = scmp.eq.s32.totalorder %s23, 0
      %p107 = por %p105, %p106
      %p108 = scmp.ne.s32.totalorder %s96, %s97
      %p109 = scmp.eq.s32.totalorder %s24, 1
      %p110 = por %p108, %p109
      %p112 = scmp.ne.s32.totalorder %s97, %s111
      %p113 = scmp.eq.s32.totalorder %s24, 0
      %p114 = por %p112, %p113
      %s115 = ssub.s32 %s25, %s37
      %p116 = scmp.eq.s32.totalorder %s115, 0
      %s118 = sadd.s32 %s117, 1
      %s119 = scalar_select %p116, %s117, %s118
      %p122 = pneg %p116
      %p123 = scmp.eq.s32.totalorder %s18, 1
      %p124 = por %p122, %p123
      %p125 = scmp.ne.s32.totalorder %s117, %s120
      %p126 = scmp.eq.s32.totalorder %s18, 0
      %p127 = por %p125, %p126
      %p128 = scmp.ne.s32.totalorder %s117, %s120
      %p129 = scmp.eq.s32.totalorder %s23, 1
      %p130 = por %p128, %p129
      %p131 = scmp.ne.s32.totalorder %s120, %s121
      %p132 = scmp.eq.s32.totalorder %s23, 0
      %p133 = por %p131, %p132
      %p134 = scmp.ne.s32.totalorder %s120, %s121
      %p135 = scmp.eq.s32.totalorder %s24, 1
      %p136 = por %p134, %p135
      %p138 = scmp.ne.s32.totalorder %s121, %s137
      %p139 = scmp.eq.s32.totalorder %s24, 0
      %p140 = por %p138, %p139
      %p141 = scmp.le.s32.totalorder 1, %s18
      %p142 = scmp.lt.s32.totalorder %s18, 3
      %p143 = pnand %p141, %p142
      %p144 = pneg %p143
      // Predicated region
      $region9: #{tpu_custom_call.1} parent=5 // pred_check
        _
      $region10: #{tpu_custom_call.1} parent=5 // pred_check_branch
        %146 = sbr.rel (%p143) target = $region12
      $region11: #{tpu_custom_call.1} parent=5 // pred_region
        %s147 = ssub.s32 %s18, 1
        // Predicated region
        $region13: #{tpu_custom_call.1} parent=11 // pred_check
          %p148 = pneg %p107
        $region14: #{tpu_custom_call.1} parent=11 // pred_check_branch
          %150 = sbr.rel (%p148) target = $region16
        $region15: #{tpu_custom_call.1} parent=11 // pred_region
          %152 = vsyncadd [#allocation6], 0
          %s153 = sshll.u32 %s2, 4
          %s154 = int_to_ptr.hbm [resolvable:$true] %s153
          %s155 = sshll.u32 [#allocation7], 4
          %s156 = int_to_ptr.vmem [resolvable:$true] %s155
          %161 = dma.hbm_to_vmem [thread:$0]  %s154, 256, %s156, [#allocation6], 128, 128, 8
        $region16: #{tpu_custom_call.1} parent=11 // pred_fallthru
          _
      $region12: #{tpu_custom_call.1} parent=5 // pred_fallthru
        _
      %p162 = scmp.lt.s32.totalorder %s18, 2
      // Predicated region
      $region17: #{tpu_custom_call.1} parent=5 // pred_check
        %p163 = pneg %p162
      $region18: #{tpu_custom_call.1} parent=5 // pred_check_branch
        %165 = sbr.rel (%p163) target = $region20
      $region19: #{tpu_custom_call.1} parent=5 // pred_region
        // Predicated region
        $region21: #{tpu_custom_call.1} parent=19 // pred_check
          %p166 = pneg %p52
        $region22: #{tpu_custom_call.1} parent=19 // pred_check_branch
          %168 = sbr.rel (%p166) target = $region24
        $region23: #{tpu_custom_call.1} parent=19 // pred_region
          %s169 = sand.u32 %s42, 1
          %s170 = scalar_lea.sflag [#allocation3], %s169
          %s171 = sand.u32 %s42, 1
          %s172 = smul.addr %s171, 8
          %s173 = scalar_lea.vmem [#allocation2], %s172
          %s174 = sadd.s32 %s25, %s26
          %176 = vsyncadd %s170, 0
          %s177 = smul.addr %s174, 8
          %s178 = scalar_lea.hbm %s0, %s177
          %s180 = sshll.u32 %s178, 4
          %s181 = int_to_ptr.hbm [resolvable:$true] %s180
          %s182 = sshll.u32 %s173, 4
          %s183 = int_to_ptr.vmem [resolvable:$true] %s182
          %185 = dma.hbm_to_vmem [thread:$0]  %s181, 128, %s183, %s170
        $region24: #{tpu_custom_call.1} parent=19 // pred_fallthru
          _
        // Predicated region
        $region25: #{tpu_custom_call.1} parent=19 // pred_check
          %p186 = pneg %p80
        $region26: #{tpu_custom_call.1} parent=19 // pred_check_branch
          %188 = sbr.rel (%p186) target = $region28
        $region27: #{tpu_custom_call.1} parent=19 // pred_region
          %s189 = sand.u32 %s18, 1
          %s190 = scalar_lea.sflag [#allocation6], %s189
          %s191 = sand.u32 %s70, 1
          %s192 = smul.addr %s191, 8
          %s193 = scalar_lea.vmem [#allocation5], %s192
          %s194 = sadd.s32 %s25, %s26
          %196 = vsyncadd %s190, 0
          %s197 = smul.addr %s194, 8
          %s198 = scalar_lea.hbm %s1, %s197
          %s200 = sshll.u32 %s198, 4
          %s201 = int_to_ptr.hbm [resolvable:$true] %s200
          %s202 = sshll.u32 %s193, 4
          %s203 = int_to_ptr.vmem [resolvable:$true] %s202
          %205 = dma.hbm_to_vmem [thread:$0]  %s201, 128, %s203, %s190
        $region28: #{tpu_custom_call.1} parent=19 // pred_fallthru
          _
      $region20: #{tpu_custom_call.1} parent=5 // pred_fallthru
        _
      %p206 = scmp.le.s32.totalorder 1, %s18
      %p207 = scmp.lt.s32.totalorder %s18, 3
      %p208 = pnand %p206, %p207
      %p209 = pneg %p208
      // Predicated region
      $region29: #{tpu_custom_call.1} parent=5 // pred_check
        _
      $region30: #{tpu_custom_call.1} parent=5 // pred_check_branch
        %211 = sbr.rel (%p208) target = $region32
      $region31: #{tpu_custom_call.1} parent=5 // pred_region
        %s212 = ssub.s32 %s18, 1
        %s213 = sand.u32 %s45, 1
        %s214 = scalar_lea.sflag [#allocation3], %s213
        %s215 = sand.u32 %s45, 1
        %s216 = smul.addr %s215, 8
        %s217 = scalar_lea.vmem [#allocation2], %s216
        // Predicated region
        $region33: #{tpu_custom_call.1} parent=31 // pred_check
          %p218 = pneg %p58
        $region34: #{tpu_custom_call.1} parent=31 // pred_check_branch
          %220 = sbr.rel (%p218) target = $region36
        $region35: #{tpu_custom_call.1} parent=31 // pred_region
          %222 = dma.done %s214, 128
        $region36: #{tpu_custom_call.1} parent=31 // pred_fallthru
          _
        %s223 = sand.u32 %s23, 1
        %s224 = scalar_lea.sflag [#allocation6], %s223
        %s225 = sand.u32 %s73, 1
        %s226 = smul.addr %s225, 8
        %s227 = scalar_lea.vmem [#allocation5], %s226
        // Predicated region
        $region37: #{tpu_custom_call.1} parent=31 // pred_check
          %p228 = pneg %p86
        $region38: #{tpu_custom_call.1} parent=31 // pred_check_branch
          %230 = sbr.rel (%p228) target = $region40
        $region39: #{tpu_custom_call.1} parent=31 // pred_region
          %232 = dma.done %s224, 128
        $region40: #{tpu_custom_call.1} parent=31 // pred_fallthru
          _
        // Predicated region
        $region41: #{tpu_custom_call.1} parent=31 // pred_check
          %p233 = pneg %p107
        $region42: #{tpu_custom_call.1} parent=31 // pred_check_branch
          %235 = sbr.rel (%p233) target = $region44
        $region43: #{tpu_custom_call.1} parent=31 // pred_region
          %237 = dma.done [#allocation6], 256
        $region44: #{tpu_custom_call.1} parent=31 // pred_fallthru
          _
        %s238 = sand.u32 %s45, 1
        %s239 = scalar_lea.sflag [#allocation3], %s238
        %s240 = sand.u32 %s45, 1
        %s241 = smul.addr %s240, 8
        %s242 = scalar_lea.vmem [#allocation2], %s241
        %p243 = pneg %p58
        %p244 = pneg %p55
        %s245 = sand.u32 %s23, 1
        %s246 = scalar_lea.sflag [#allocation6], %s245
        %s247 = sand.u32 %s73, 1
        %s248 = smul.addr %s247, 8
        %s249 = scalar_lea.vmem [#allocation5], %s248
        %p250 = pneg %p86
        %p251 = pneg %p83
        %p252 = pneg %p107
        %p253 = pneg %p104
        %p254 = pneg %p133
        %p255 = pneg %p130
        %s256 = sand.u32 %s120, 1
        %s257 = scalar_lea.sflag [#allocation4], %s256
        %s258 = sand.u32 %s120, 1
        %s259 = smul.addr %s258, 8
        %s260 = scalar_lea.vmem [#allocation8], %s259
        %s261 = sadd.s32 %s27, %s28
        %s262 = sadd.s32 %s27, %s28
        %p263 = scmp.eq.s32.totalorder %s28, 0
        // Predicated region
        $region45: #{tpu_custom_call.1} parent=31 // pred_check
          %p264 = pneg %p263
        $region46: #{tpu_custom_call.1} parent=31 // pred_check_branch
          %266 = sbr.rel (%p264) target = $region48
        $region47: #{tpu_custom_call.1} parent=31 // pred_region
          %267 = vst [vmem:[%s260] sm:$0xff] 0.0
        $region48: #{tpu_custom_call.1} parent=31 // pred_fallthru
          _
        %v268 = vld [vmem:[%s217] sm:$0xff]
        %v269 = vlaneseq
        %v270 = vand.u32 %v269, 127
        %v271 = vld [vmem:[%s227] sm:$0xff]
        %v272 = vld [vmem:[#allocation7] sm:$0xff]
        %v273 = vld [vmem:[#allocation7 + $0x8] sm:$0xff]
        %vm274 = vcmask 130048
        %v276 = vsel %vm274, %v271, 0
        %278 = vmatpush.msra.mxu0 0.0
        %279 = vmatpush.msra.mxu0 0.0
        %280 = vmatpush.msra.mxu0 0.0
        %281 = vmatpush.msra.mxu0 0.0
        %282 = vmatpush.msra.mxu0 0.0
        %283 = vmatpush.msra.mxu0 0.0
        %284 = vmatpush.msra.mxu0 0.0
        %285 = vmatpush.msra.mxu0 0.0
        %286 = vmatpush.msra.mxu0 0.0
        %287 = vmatpush.msra.mxu0 0.0
        %288 = vmatpush.msra.mxu0 0.0
        %289 = vmatpush.msra.mxu0 0.0
        %290 = vmatpush.msra.mxu0 0.0
        %291 = vmatpush.msra.mxu0 0.0
        %292 = vmatpush.msra.mxu0 %v273
        %293 = vmatpush.msra.mxu0 %v272
        %294 = vmatmul.f32.gmra.mxu0 %v276
        %v295 = vpop.f32.mrf.mxu0
        %v296 = vadd.f32 0.0, %v295
        %297 = vdwg.mxu0
        %v298 = vcvt.f32.s32.to.zero.pseudo %v296
        %vm299 = vcmp.eq.s32.totalorder %v270, %v298
        %v300 = vsel %vm299, %v268, 0.0
        %v301 = vld [vmem:[%s260] sm:$0x1]
        %v302 = vrot.slane %v300, 4
        %v303 = vadd.f32 %v300, %v302
        %v304 = vrot.slane %v303, 2
        %v305 = vadd.f32 %v303, %v304
        %v306 = vrot.slane %v305, 1
        %v307 = vadd.f32 %v305, %v306
        %v308 = vadd.f32 %v301, %v307
        %309 = vst [vmem:[%s260] sm:$0x1] %v308
        %s310 = sand.u32 %s120, 1
        %s311 = scalar_lea.sflag [#allocation4], %s310
        %s312 = sand.u32 %s120, 1
        %s313 = smul.addr %s312, 8
        %s314 = scalar_lea.vmem [#allocation8], %s313
        // Predicated region
        $region49: #{tpu_custom_call.1} parent=31 // pred_check
          %p315 = pneg %p130
        $region50: #{tpu_custom_call.1} parent=31 // pred_check_branch
          %317 = sbr.rel (%p315) target = $region52
        $region51: #{tpu_custom_call.1} parent=31 // pred_region
          %319 = vsyncadd %s311, 0
          %s320 = smul.addr %s27, 8
          %s321 = scalar_lea.hbm %s3, %s320
          %s323 = sshll.u32 %s314, 4
          %s324 = int_to_ptr.vmem [resolvable:$true] %s323
          %s325 = sshll.u32 %s321, 4
          %s326 = int_to_ptr.hbm [resolvable:$true] %s325
          %328 = dma.vmem_to_hbm [thread:$0]  %s324, 128, %s326, %s311
        $region52: #{tpu_custom_call.1} parent=31 // pred_fallthru
          _
      $region32: #{tpu_custom_call.1} parent=5 // pred_fallthru
        _
      %p329 = scmp.le.s32.totalorder 2, %s18
      // Predicated region
      $region53: #{tpu_custom_call.1} parent=5 // pred_check
        %p330 = pneg %p329
      $region54: #{tpu_custom_call.1} parent=5 // pred_check_branch
        %332 = sbr.rel (%p330) target = $region56
      $region55: #{tpu_custom_call.1} parent=5 // pred_region
        %s333 = ssub.s32 %s18, 2
        // Predicated region
        $region57: #{tpu_custom_call.1} parent=55 // pred_check
          %p334 = pneg %p136
        $region58: #{tpu_custom_call.1} parent=55 // pred_check_branch
          %336 = sbr.rel (%p334) target = $region60
        $region59: #{tpu_custom_call.1} parent=55 // pred_region
          %s337 = sand.u32 %s121, 1
          %s338 = scalar_lea.sflag [#allocation4], %s337
          %s339 = sand.u32 %s121, 1
          %s340 = smul.addr %s339, 8
          %s341 = scalar_lea.vmem [#allocation8], %s340
          %343 = dma.done %s338, 128
        $region60: #{tpu_custom_call.1} parent=55 // pred_fallthru
          _
      $region56: #{tpu_custom_call.1} parent=5 // pred_fallthru
        _
    $region6: #{tpu_custom_call.1} parent=1 // loop_footer
      %s22 = sadd.s32 1, %s18
    $region7: #{tpu_custom_call.1} parent=1 // loop_footer_branch
      %17 = sbr.rel target = $region3
    $region8: #{tpu_custom_call.1} parent=1 // loop_exit
      _
    %344 = vsyncpa [#allocation3], 1
    %s345 = scalar_lea.sflag [#allocation3], 1
    %346 = vsyncpa %s345, 1
    %347 = vsyncpa [#allocation6], 1
    %s348 = scalar_lea.sflag [#allocation6], 1
    %349 = vsyncpa %s348, 1
    %350 = vsyncpa [#allocation4], 1
    %s351 = scalar_lea.sflag [#allocation4], 1
    %352 = vsyncpa %s351, 1

</llo_original>
